<compile_context>
chip_gen: v5e
topology: v5e:2x2
jax: 0.10.0
libtpu: 0.0.40
codegen_flags: <defaults>
</compile_context>

<pallas_src>
import functools

import jax
import jax.numpy as jnp
import numpy as np
from jax.experimental import pallas as pl
from jax.experimental.pallas import tpu as pltpu


def _round_up(n, m):
    return ((n + m - 1) // m) * m


# ---------------------------------------------------------------------------
# Grouped expert MLP kernel (routed dispatch).
#
# Grid = (row_tiles, hidden_tiles). Rows are token/expert assignments already
# sorted + padded by expert in the wrapper; tile_expert_ref[i] (SMEM, scalar
# prefetched) selects which expert's weights the index_maps stream for row
# tile i.  Per hidden chunk:
#   h_chunk = GELU(x @ W1[e][:, chunk] + b1[e][chunk])      (f32)
#   acc    += h_chunk(bf16) @ W2[e][chunk, :]               (f32 accumulate)
# and `acc + b2[e]` is stored once, lane-dense, at the last chunk.
# ---------------------------------------------------------------------------
def _grouped_expert_mlp_kernel(
    tile_expert_ref, x_ref, w1_ref, b1_ref, w2_ref, b2_ref, o_ref, acc_ref
):
    del tile_expert_ref  # consumed by the index_maps only
    hi = pl.program_id(1)

    @pl.when(hi == 0)
    def _():
        acc_ref[...] = jnp.zeros_like(acc_ref)

    # bf16 x bf16 -> f32 on the MXU.
    h = jnp.dot(x_ref[...], w1_ref[...], preferred_element_type=jnp.float32)
    h = jax.nn.gelu(h + b1_ref[...])                      # f32 (tile_rows, tH)
    acc_ref[...] += jnp.dot(
        h.astype(w2_ref.dtype), w2_ref[...], preferred_element_type=jnp.float32
    )

    @pl.when(hi == pl.num_programs(1) - 1)
    def _():
        o_ref[...] = (acc_ref[...] + b2_ref[...]).astype(o_ref.dtype)


def grouped_expert_mlp(x_sorted, tile_expert, w1, b1, w2, b2, *, tile_rows, tile_hidden):
    P, D = x_sorted.shape
    E, _, H = w1.shape
    assert P % tile_rows == 0 and H % tile_hidden == 0
    num_row_tiles = P // tile_rows
    num_h_tiles = H // tile_hidden
    return pl.pallas_call(
        _grouped_expert_mlp_kernel,
        out_shape=jax.ShapeDtypeStruct((P, D), jnp.float32),
        grid_spec=pltpu.PrefetchScalarGridSpec(
            num_scalar_prefetch=1,                          # tile_expert -> SMEM
            grid=(num_row_tiles, num_h_tiles),
            in_specs=[
                # tokens of row tile i (already grouped by expert)
                pl.BlockSpec((tile_rows, D), lambda i, h, te: (i, 0)),
                # W1[e][:, h-chunk]  /  b1[e][h-chunk]
                pl.BlockSpec((pl.Squeezed(), D, tile_hidden), lambda i, h, te: (te[i], 0, h)),
                pl.BlockSpec((pl.Squeezed(), 1, tile_hidden), lambda i, h, te: (te[i], 0, h)),
                # W2[e][h-chunk, :]  /  b2[e]
                pl.BlockSpec((pl.Squeezed(), tile_hidden, D), lambda i, h, te: (te[i], h, 0)),
                pl.BlockSpec((pl.Squeezed(), 1, D), lambda i, h, te: (te[i], 0, 0)),
            ],
            out_specs=pl.BlockSpec((tile_rows, D), lambda i, h, te: (i, 0)),
            scratch_shapes=[pltpu.VMEM((tile_rows, D), jnp.float32)],
        ),
        compiler_params=pltpu.CompilerParams(
            # Row tiles are independent -> megacore-parallel on v7x;
            # hidden chunks are the (inner) reduction axis.
            dimension_semantics=("parallel", "arbitrary"),
            # Explicit scoped VMEM budget; raise + grow tile_hidden on
            # v5e/v6e (128 MiB), keep tiles smaller on v7x (64 MiB physical).
            vmem_limit_bytes=32 * 1024 * 1024,
        ),
    )(tile_expert, x_sorted, w1, b1, w2, b2)


# ---------------------------------------------------------------------------
# Routing metadata (all static shapes): sort assignments by expert, pad each
# expert group to a multiple of tile_rows.
#   P = round_up(B*K, tile_rows) + E*tile_rows   (worst-case padded length)
# ---------------------------------------------------------------------------
def _route_by_expert(topk_idx, num_expert, tile_rows):
    B, K = topk_idx.shape
    N = B * K
    P = _round_up(N, tile_rows) + num_expert * tile_rows

    flat_expert = topk_idx.reshape(-1)                          # (N,)
    order = jnp.argsort(flat_expert, stable=True)               # assignments sorted by expert
    sorted_expert = flat_expert[order]

    group_sizes = jnp.bincount(flat_expert, length=num_expert)  # (E,)
    padded_sizes = ((group_sizes + tile_rows - 1) // tile_rows) * tile_rows
    padded_end = jnp.cumsum(padded_sizes)
    padded_start = padded_end - padded_sizes
    unpadded_start = jnp.cumsum(group_sizes) - group_sizes

    rank_in_group = jnp.arange(N, dtype=jnp.int32) - unpadded_start[sorted_expert]
    dest_sorted = (padded_start[sorted_expert] + rank_in_group).astype(jnp.int32)

    src_token = (order // K).astype(jnp.int32)
    row_ids = jnp.zeros((P,), jnp.int32).at[dest_sorted].set(src_token)     # slot -> token
    dest = jnp.zeros((N,), jnp.int32).at[order].set(dest_sorted).reshape(B, K)

    num_tiles = P // tile_rows
    tile_start = jnp.arange(num_tiles, dtype=jnp.int32) * tile_rows
    tile_expert = jnp.clip(
        jnp.searchsorted(padded_end, tile_start, side="right"), 0, num_expert - 1
    ).astype(jnp.int32)
    return row_ids, dest, tile_expert


# ---------------------------------------------------------------------------
# Full FixedFMoE forward (world_size=1): gate + routed dispatch + combine.
# ---------------------------------------------------------------------------
@functools.partial(jax.jit, static_argnames=("top_k", "tile_rows", "tile_hidden"))
def fixed_fmoe_forward(x, wg, bg, w1, b1, w2, b2, *, top_k, tile_rows=32, tile_hidden=128):
    E = w1.shape[0]

    # --- NaiveGate: tiny lane-sparse (B, E) GEMM + top-k + softmax -> XLA -----
    logits = jnp.dot(x, wg, precision=jax.lax.Precision.HIGHEST) + bg
    topk_val, topk_idx = jax.lax.top_k(logits, top_k)
    score = jax.nn.softmax(topk_val, axis=-1)
    topk_idx = topk_idx.astype(jnp.int32)

    # --- routed dispatch (scatter): group assignments by expert ---------------
    row_ids, dest, tile_expert = _route_by_expert(topk_idx, E, tile_rows)
    x_sorted = x[row_ids].astype(jnp.bfloat16)              # (P, D) bf16 for the MXU

    # --- grouped expert MLP (Pallas) ------------------------------------------
    y_sorted = grouped_expert_mlp(
        x_sorted, tile_expert, w1, b1, w2, b2,
        tile_rows=tile_rows, tile_hidden=tile_hidden)        # (P, D) f32

    # --- combine: gather each token's K expert outputs, weight by gate scores -
    gathered = y_sorted[dest]                                # (B, K, D)
    return jnp.einsum("bk,bkd->bd", score, gathered)


# Pure-JAX reference with the same bf16-input / f32-accumulate math.
def _reference(x, wg, bg, w1, b1, w2, b2, top_k):
    hp = jax.lax.Precision.HIGHEST
    logits = jnp.dot(x, wg, precision=hp) + bg
    topk_val, topk_idx = jax.lax.top_k(logits, top_k)
    score = jax.nn.softmax(topk_val, axis=-1)

    xb = x.astype(jnp.bfloat16).astype(jnp.float32)
    w1f = w1.astype(jnp.float32)
    w2f = w2.astype(jnp.float32)
    h = jax.nn.gelu(jnp.einsum("bd,edh->ebh", xb, w1f, precision=hp) + b1)   # (E,B,H)
    hb = h.astype(jnp.bfloat16).astype(jnp.float32)
    y = jnp.einsum("ebh,ehd->ebd", hb, w2f, precision=hp) + b2               # (E,B,D)
    gathered = jnp.take_along_axis(jnp.moveaxis(y, 0, 1), topk_idx[:, :, None], axis=1)
    return jnp.einsum("bk,bkd->bd", score, gathered)


if __name__ == "__main__":
    # Small, lane-aligned shapes (D, H multiples of 128; row tile multiple of 16).
    B = 64            # tokens (batch dimension of moe_inp)
    d_model = 128
    hidden = 256      # expert MLP hidden size
    num_expert = 4
    top_k = 2

    key = jax.random.PRNGKey(0)
    k_x, k_wg, k_w1, k_w2, k_b1, k_b2 = jax.random.split(key, 6)

    x = jax.random.normal(k_x, (B, d_model), jnp.float32)

    # Gate params.
    wg = jax.random.normal(k_wg, (d_model, num_expert), jnp.float32) / np.sqrt(d_model)
    bg = jnp.zeros((num_expert,), jnp.float32)

    # Stacked expert MLP params: weights bf16 (f32 accumulation in-kernel), biases f32.
    w1 = (jax.random.normal(k_w1, (num_expert, d_model, hidden), jnp.float32)
          / np.sqrt(d_model)).astype(jnp.bfloat16)
    b1 = jax.random.normal(k_b1, (num_expert, 1, hidden), jnp.float32) * 0.01
    w2 = (jax.random.normal(k_w2, (num_expert, hidden, d_model), jnp.float32)
          / np.sqrt(hidden)).astype(jnp.bfloat16)
    b2 = jax.random.normal(k_b2, (num_expert, 1, d_model), jnp.float32) * 0.01

    out = fixed_fmoe_forward(x, wg, bg, w1, b1, w2, b2, top_k=top_k)
    out = jax.block_until_ready(out)

    ref = _reference(x, wg, bg, w1, b1, w2, b2, top_k)
    assert out.shape == (B, d_model)
    np.testing.assert_allclose(np.asarray(out), np.asarray(ref), atol=5e-3, rtol=5e-3)

    print("KERNEL_OK")
</pallas_src>

<mosaic_0001>
module attributes {stable_mosaic.version = 11 : i64} {
  func.func @_grouped_expert_mlp_kernel(%arg0: i32, %arg1: i32, %arg2: memref<8xi32, #tpu.memory_space<smem>>, %arg3: memref<32x128xbf16, #tpu.memory_space<vmem>>, %arg4: memref<1x128x128xbf16, #tpu.memory_space<vmem>>, %arg5: memref<1x1x128xf32, #tpu.memory_space<vmem>>, %arg6: memref<1x128x128xbf16, #tpu.memory_space<vmem>>, %arg7: memref<1x1x128xf32, #tpu.memory_space<vmem>>, %arg8: memref<32x128xf32, #tpu.memory_space<vmem>>, %arg9: memref<32x128xf32, #tpu.memory_space<vmem>>) attributes {dimension_semantics = [#tpu.dimension_semantics<parallel>, #tpu.dimension_semantics<arbitrary>], iteration_bounds = array<i64: 8, 2>, scalar_prefetch = 1 : i64, scratch_operands = 1 : i64, tpu.core_type = #tpu.core_type<tc>, window_params = [{transform_indices = @transform_0, window_bounds = array<i64: 32, 128>}, {transform_indices = @transform_1, window_bounds = array<i64: 1, 128, 128>}, {transform_indices = @transform_2, window_bounds = array<i64: 1, 1, 128>}, {transform_indices = @transform_3, window_bounds = array<i64: 1, 128, 128>}, {transform_indices = @transform_4, window_bounds = array<i64: 1, 1, 128>}, {transform_indices = @transform_5, window_bounds = array<i64: 32, 128>}]} {
    %c0_i32 = arith.constant 0 : i32
    %0 = arith.cmpi eq, %arg1, %c0_i32 : i32
    %1 = arith.extui %0 : i1 to i32
    %c0_i32_0 = arith.constant 0 : i32
    %2 = arith.cmpi ne, %1, %c0_i32_0 : i32
    scf.if %2 {
      %cst_21 = arith.constant 0.000000e+00 : f32
      %34 = vector.broadcast %cst_21 : f32 to vector<32x128xf32>
      %c0_22 = arith.constant 0 : index
      %c0_23 = arith.constant 0 : index
      %35 = vector.load %arg9[%c0_22, %c0_23] : memref<32x128xf32, #tpu.memory_space<vmem>>, vector<32x128xf32>
      tpu.vector_store %arg9[%c0_22, %c0_23], %34 {strides = array<i32>} : memref<32x128xf32, #tpu.memory_space<vmem>>, vector<32x128xf32>,
    } else {
    }
    %c0 = arith.constant 0 : index
    %c0_1 = arith.constant 0 : index
    %3 = vector.load %arg3[%c0, %c0_1] : memref<32x128xbf16, #tpu.memory_space<vmem>>, vector<32x128xbf16>
    %c0_2 = arith.constant 0 : index
    %c0_3 = arith.constant 0 : index
    %c0_4 = arith.constant 0 : index
    %4 = vector.load %arg4[%c0_2, %c0_3, %c0_4] : memref<1x128x128xbf16, #tpu.memory_space<vmem>>, vector<1x128x128xbf16>
    %5 = vector.shape_cast %4 : vector<1x128x128xbf16> to vector<128x128xbf16>
    %cst = arith.constant dense<0.000000e+00> : vector<32x128xf32>
    %6 = tpu.matmul %3, %5, %cst {dimension_numbers = #tpu.dot_dimension_numbers<[1], [0], [0], [1], [0, 0, 1, 1], [], []>} : vector<32x128xbf16>, vector<128x128xbf16>, vector<32x128xf32> -> vector<32x128xf32>
    %c0_5 = arith.constant 0 : index
    %c0_6 = arith.constant 0 : index
    %c0_7 = arith.constant 0 : index
    %7 = vector.load %arg5[%c0_5, %c0_6, %c0_7] : memref<1x1x128xf32, #tpu.memory_space<vmem>>, vector<1x1x128xf32>
    %8 = vector.shape_cast %7 : vector<1x1x128xf32> to vector<1x128xf32>
    %9 = vector.broadcast %8 : vector<1x128xf32> to vector<32x128xf32>
    %10 = arith.addf %6, %9 : vector<32x128xf32>
    %11 = arith.mulf %10, %10 : vector<32x128xf32>
    %12 = arith.mulf %10, %11 : vector<32x128xf32>
    %cst_8 = arith.constant 4.471500e-02 : f32
    %13 = vector.broadcast %cst_8 : f32 to vector<32x128xf32>
    %14 = arith.mulf %13, %12 : vector<32x128xf32>
    %15 = arith.addf %10, %14 : vector<32x128xf32>
    %cst_9 = arith.constant 0.797884583 : f32
    %16 = vector.broadcast %cst_9 : f32 to vector<32x128xf32>
    %17 = arith.mulf %16, %15 : vector<32x128xf32>
    %18 = math.tanh %17 : vector<32x128xf32>
    %cst_10 = arith.constant 1.000000e+00 : f32
    %19 = vector.broadcast %cst_10 : f32 to vector<32x128xf32>
    %20 = arith.addf %19, %18 : vector<32x128xf32>
    %cst_11 = arith.constant 5.000000e-01 : f32
    %21 = vector.broadcast %cst_11 : f32 to vector<32x128xf32>
    %22 = arith.mulf %21, %20 : vector<32x128xf32>
    %23 = arith.mulf %10, %22 : vector<32x128xf32>
    %c0_12 = arith.constant 0 : index
    %c0_13 = arith.constant 0 : index
    %24 = vector.load %arg9[%c0_12, %c0_13] : memref<32x128xf32, #tpu.memory_space<vmem>>, vector<32x128xf32>
    %25 = arith.truncf %23 : vector<32x128xf32> to vector<32x128xbf16>
    %c0_14 = arith.constant 0 : index
    %c0_15 = arith.constant 0 : index
    %c0_16 = arith.constant 0 : index
    %26 = vector.load %arg6[%c0_14, %c0_15, %c0_16] : memref<1x128x128xbf16, #tpu.memory_space<vmem>>, vector<1x128x128xbf16>
    %27 = vector.shape_cast %26 : vector<1x128x128xbf16> to vector<128x128xbf16>
    %cst_17 = arith.constant dense<0.000000e+00> : vector<32x128xf32>
    %28 = tpu.matmul %25, %27, %cst_17 {dimension_numbers = #tpu.dot_dimension_numbers<[1], [0], [0], [1], [0, 0, 1, 1], [], []>} : vector<32x128xbf16>, vector<128x128xbf16>, vector<32x128xf32> -> vector<32x128xf32>
    %29 = arith.addf %24, %28 : vector<32x128xf32>
    %c0_18 = arith.constant 0 : index
    %c0_19 = arith.constant 0 : index
    %30 = vector.load %arg9[%c0_18, %c0_19] : memref<32x128xf32, #tpu.memory_space<vmem>>, vector<32x128xf32>
    tpu.vector_store %arg9[%c0_18, %c0_19], %29 {strides = array<i32>} : memref<32x128xf32, #tpu.memory_space<vmem>>, vector<32x128xf32>,
    %c1_i32 = arith.constant 1 : i32
    %31 = arith.cmpi eq, %arg1, %c1_i32 : i32
    %32 = arith.extui %31 : i1 to i32
    %c0_i32_20 = arith.constant 0 : i32
    %33 = arith.cmpi ne, %32, %c0_i32_20 : i32
    scf.if %33 {
      %c0_21 = arith.constant 0 : index
      %c0_22 = arith.constant 0 : index
      %34 = vector.load %arg9[%c0_21, %c0_22] : memref<32x128xf32, #tpu.memory_space<vmem>>, vector<32x128xf32>
      %c0_23 = arith.constant 0 : index
      %c0_24 = arith.constant 0 : index
      %c0_25 = arith.constant 0 : index
      %35 = vector.load %arg7[%c0_23, %c0_24, %c0_25] : memref<1x1x128xf32, #tpu.memory_space<vmem>>, vector<1x1x128xf32>
      %36 = vector.shape_cast %35 : vector<1x1x128xf32> to vector<1x128xf32>
      %37 = vector.broadcast %36 : vector<1x128xf32> to vector<32x128xf32>
      %38 = arith.addf %34, %37 : vector<32x128xf32>
      %c0_26 = arith.constant 0 : index
      %c0_27 = arith.constant 0 : index
      %39 = vector.load %arg8[%c0_26, %c0_27] : memref<32x128xf32, #tpu.memory_space<vmem>>, vector<32x128xf32>
      tpu.vector_store %arg8[%c0_26, %c0_27], %38 {strides = array<i32>} : memref<32x128xf32, #tpu.memory_space<vmem>>, vector<32x128xf32>,
    } else {
    }
    return
  }
  func.func @transform_0(%arg0: i32, %arg1: i32, %arg2: memref<8xi32, #tpu.memory_space<smem>>) -> (i32, i32) {
    %c0_i32 = arith.constant 0 : i32
    %c0_i32_0 = arith.constant 0 : i32
    return %arg0, %c0_i32 : i32, i32
  }
  func.func @transform_1(%arg0: i32, %arg1: i32, %arg2: memref<8xi32, #tpu.memory_space<smem>>) -> (i32, i32, i32) {
    %0 = arith.index_cast %arg0 : i32 to index
    %1 = memref.load %arg2[%0] : memref<8xi32, #tpu.memory_space<smem>>
    %c0_i32 = arith.constant 0 : i32
    %c0_i32_0 = arith.constant 0 : i32
    return %1, %c0_i32, %arg1 : i32, i32, i32
  }
  func.func @transform_2(%arg0: i32, %arg1: i32, %arg2: memref<8xi32, #tpu.memory_space<smem>>) -> (i32, i32, i32) {
    %0 = arith.index_cast %arg0 : i32 to index
    %1 = memref.load %arg2[%0] : memref<8xi32, #tpu.memory_space<smem>>
    %c0_i32 = arith.constant 0 : i32
    %c0_i32_0 = arith.constant 0 : i32
    return %1, %c0_i32, %arg1 : i32, i32, i32
  }
  func.func @transform_3(%arg0: i32, %arg1: i32, %arg2: memref<8xi32, #tpu.memory_space<smem>>) -> (i32, i32, i32) {
    %0 = arith.index_cast %arg0 : i32 to index
    %1 = memref.load %arg2[%0] : memref<8xi32, #tpu.memory_space<smem>>
    %c0_i32 = arith.constant 0 : i32
    %c0_i32_0 = arith.constant 0 : i32
    return %1, %arg1, %c0_i32 : i32, i32, i32
  }
  func.func @transform_4(%arg0: i32, %arg1: i32, %arg2: memref<8xi32, #tpu.memory_space<smem>>) -> (i32, i32, i32) {
    %0 = arith.index_cast %arg0 : i32 to index
    %1 = memref.load %arg2[%0] : memref<8xi32, #tpu.memory_space<smem>>
    %c0_i32 = arith.constant 0 : i32
    %c0_i32_0 = arith.constant 0 : i32
    %c0_i32_1 = arith.constant 0 : i32
    return %1, %c0_i32, %c0_i32_0 : i32, i32, i32
  }
  func.func @transform_5(%arg0: i32, %arg1: i32, %arg2: memref<8xi32, #tpu.memory_space<smem>>) -> (i32, i32) {
    %c0_i32 = arith.constant 0 : i32
    %c0_i32_0 = arith.constant 0 : i32
    return %arg0, %c0_i32 : i32, i32
  }
}

</mosaic_0001>

<llo_original>
// kernel: custom-call
$region0: #{custom-call}
  %s0 = inlined_call_operand.vmem [shape: u32[8], index: 0, kind: output, shape index: {}]

// kernel: fixed_fmoe_forward.1
$region0: #{fixed_fmoe_forward.1}
  #allocation0 [shape = 'u32[]', space=smem, size = 0x4, offset = 0x4, fixed_abs, tag = 'smem constant byte address 0x4 - core index']
  #allocation1 [shape = 'u32[72,128]{1,0:T(1,128)}', space=vmem, size = 0x9000, scoped, tag = 'internal scratch']
  #allocation2 [shape = 'f32[32,128]{1,0:T(8,128)}', space=vmem, size = 0x4000, scoped, tag = 'scratch operand']
  #allocation3 [shape = 's32[1]{0}', space=sflag, size = 0x4, scoped, tag = 'scoped memory for fixed_fmoe_forward.1']
  #allocation4 [shape = 'u8[512]{0}', space=smem, size = 0x200, scoped, tag = 'prefetched SMEM operand 0']
  %s0 = inlined_call_operand.vmem [shape: s32[8], index: 0, kind: input, shape index: {}]
  %s1 = inlined_call_operand.vmem [shape: bf16[256,128], index: 1, kind: input, shape index: {}]
  %s2 = inlined_call_operand.vmem [shape: bf16[4,128,256], index: 2, kind: input, shape index: {}]
  %s3 = inlined_call_operand.vmem [shape: f32[4,1,256], index: 3, kind: input, shape index: {}]
  %s4 = inlined_call_operand.vmem [shape: bf16[4,256,128], index: 4, kind: input, shape index: {}]
  %s5 = inlined_call_operand.vmem [shape: f32[4,1,128], index: 5, kind: input, shape index: {}]
  %s6 = inlined_call_operand.vmem [shape: f32[256,128], index: 6, kind: output, shape index: {}]
  %s7 = sld [smem:[#allocation0]]
  $region102: #{fixed_fmoe_forward.1} parent=0
    _
  %s9 = ssub.s32 1, %s7
  %s10 = scalar_select 0, %s9, %s7
  %s12 = sshll.u32 %s0, 4
  %s13 = int_to_ptr.vmem [resolvable:$true] %s12
  %15 = dma.vmem_to_smem %s13, 16, [#allocation4], [#allocation3]
  %17 = dma.done [#allocation3], 16
  %18 = sfence
  $region1: #{fixed_fmoe_forward.1} parent=0
    #allocation5 [shape = 'u8[65536]{0}', space=vmem, size = 0x10000, scoped, tag = 'input window, operand 2']
    loop: start=0, step=1, limit=18
    $region2: #{fixed_fmoe_forward.1} parent=1 // loop_pre_header
      _
    $region3: #{fixed_fmoe_forward.1} parent=1 // loop_header
      %s20 = sphi 0, %s24
      %p21 = scmp.ge.s32.totalorder %s20, 18
      %s27 = sphi 0, %s39
      %s28 = sphi 0, %s35
      %s29 = sphi 0, %s27
      %s30 = sphi 0, %s28
      %s31 = sphi 0, %s29
      %s32 = sphi 0, %s30
      %s42 = sphi 0, %s44
      %s45 = sphi 0, %s42
      %s46 = sphi 0, %s45
      %s62 = sphi 0, %s46
      %s72 = sphi 0, %s74
      %s75 = sphi 0, %s72
      %s76 = sphi 0, %s75
      %s92 = sphi 0, %s76
      %s102 = sphi 0, %s104
      %s105 = sphi 0, %s102
      %s106 = sphi 0, %s105
      %s122 = sphi 0, %s106
      %s132 = sphi 0, %s134
      %s135 = sphi 0, %s132
      %s136 = sphi 0, %s135
      %s152 = sphi 0, %s136
      %s160 = sphi 0, %s162
      %s163 = sphi 0, %s160
      %s164 = sphi 0, %s163
      %s180 = sphi 0, %s164
      %s186 = sphi 0, %s188
      %s189 = sphi 0, %s186
      %s190 = sphi 0, %s189
      %s206 = sphi 0, %s190
    $region4: #{fixed_fmoe_forward.1} parent=1 // loop_header_branch
      %23 = sbr.rel (%p21) target = $region8
    $region5: #{fixed_fmoe_forward.1} parent=1 // loop_body
      %s25 = ssub.s32 %s20, 1
      %s26 = ssub.s32 %s20, 2
      %s33 = sadd.s32 1, %s28
      %p34 = scmp.ge.s32.totalorder %s33, 2
      %s35 = scalar_select %p34, 0, %s33
      %s36 = sadd.s32 1, %s27
      %s37 = scalar_select %p34, %s36, %s27
      %p38 = scmp.ge.s32.totalorder %s37, 8
      %s39 = scalar_select %p38, 0, %s37
      %s40 = ssub.s32 %s27, %s39
      %p41 = scmp.eq.s32.totalorder %s40, 0
      %s43 = sadd.s32 %s42, 1
      %s44 = scalar_select %p41, %s42, %s43
      %p47 = pneg %p41
      %p48 = scmp.eq.s32.totalorder %s20, 15
      %p49 = por %p47, %p48
      %p50 = scmp.ne.s32.totalorder %s42, %s45
      %p51 = scmp.eq.s32.totalorder %s20, 0
      %p52 = por %p50, %p51
      %p53 = scmp.ne.s32.totalorder %s42, %s45
      %p54 = scmp.eq.s32.totalorder %s25, 15
      %p55 = por %p53, %p54
      %p56 = scmp.ne.s32.totalorder %s45, %s46
      %p57 = scmp.eq.s32.totalorder %s25, 0
      %p58 = por %p56, %p57
      %p59 = scmp.ne.s32.totalorder %s45, %s46
      %p60 = scmp.eq.s32.totalorder %s26, 15
      %p61 = por %p59, %p60
      %p63 = scmp.ne.s32.totalorder %s46, %s62
      %p64 = scmp.eq.s32.totalorder %s26, 0
      %p65 = por %p63, %p64
      %s66 = sld [smem:[#allocation4 + %s27]]
      %s67 = sld [smem:[#allocation4 + %s39]]
      %s68 = ssub.s32 %s66, %s67
      %s69 = ssub.s32 %s28, %s35
      %s70 = sor.u32 %s68, %s69
      %p71 = scmp.eq.s32.totalorder %s70, 0
      %s73 = sadd.s32 %s72, 1
      %s74 = scalar_select %p71, %s72, %s73
      %p77 = pneg %p71
      %p78 = scmp.eq.s32.totalorder %s20, 15
      %p79 = por %p77, %p78
      %p80 = scmp.ne.s32.totalorder %s72, %s75
      %p81 = scmp.eq.s32.totalorder %s20, 0
      %p82 = por %p80, %p81
      %p83 = scmp.ne.s32.totalorder %s72, %s75
      %p84 = scmp.eq.s32.totalorder %s25, 15
      %p85 = por %p83, %p84
      %p86 = scmp.ne.s32.totalorder %s75, %s76
      %p87 = scmp.eq.s32.totalorder %s25, 0
      %p88 = por %p86, %p87
      %p89 = scmp.ne.s32.totalorder %s75, %s76
      %p90 = scmp.eq.s32.totalorder %s26, 15
      %p91 = por %p89, %p90
      %p93 = scmp.ne.s32.totalorder %s76, %s92
      %p94 = scmp.eq.s32.totalorder %s26, 0
      %p95 = por %p93, %p94
      %s96 = sld [smem:[#allocation4 + %s27]]
      %s97 = sld [smem:[#allocation4 + %s39]]
      %s98 = ssub.s32 %s96, %s97
      %s99 = ssub.s32 %s28, %s35
      %s100 = sor.u32 %s98, %s99
      %p101 = scmp.eq.s32.totalorder %s100, 0
      %s103 = sadd.s32 %s102, 1
      %s104 = scalar_select %p101, %s102, %s103
      %p107 = pneg %p101
      %p108 = scmp.eq.s32.totalorder %s20, 15
      %p109 = por %p107, %p108
      %p110 = scmp.ne.s32.totalorder %s102, %s105
      %p111 = scmp.eq.s32.totalorder %s20, 0
      %p112 = por %p110, %p111
      %p113 = scmp.ne.s32.totalorder %s102, %s105
      %p114 = scmp.eq.s32.totalorder %s25, 15
      %p115 = por %p113, %p114
      %p116 = scmp.ne.s32.totalorder %s105, %s106
      %p117 = scmp.eq.s32.totalorder %s25, 0
      %p118 = por %p116, %p117
      %p119 = scmp.ne.s32.totalorder %s105, %s106
      %p120 = scmp.eq.s32.totalorder %s26, 15
      %p121 = por %p119, %p120
      %p123 = scmp.ne.s32.totalorder %s106, %s122
      %p124 = scmp.eq.s32.totalorder %s26, 0
      %p125 = por %p123, %p124
      %s126 = sld [smem:[#allocation4 + %s27]]
      %s127 = sld [smem:[#allocation4 + %s39]]
      %s128 = ssub.s32 %s126, %s127
      %s129 = ssub.s32 %s28, %s35
      %s130 = sor.u32 %s128, %s129
      %p131 = scmp.eq.s32.totalorder %s130, 0
      %s133 = sadd.s32 %s132, 1
      %s134 = scalar_select %p131, %s132, %s133
      %p137 = pneg %p131
      %p138 = scmp.eq.s32.totalorder %s20, 15
      %p139 = por %p137, %p138
      %p140 = scmp.ne.s32.totalorder %s132, %s135
      %p141 = scmp.eq.s32.totalorder %s20, 0
      %p142 = por %p140, %p141
      %p143 = scmp.ne.s32.totalorder %s132, %s135
      %p144 = scmp.eq.s32.totalorder %s25, 15
      %p145 = por %p143, %p144
      %p146 = scmp.ne.s32.totalorder %s135, %s136
      %p147 = scmp.eq.s32.totalorder %s25, 0
      %p148 = por %p146, %p147
      %p149 = scmp.ne.s32.totalorder %s135, %s136
      %p150 = scmp.eq.s32.totalorder %s26, 15
      %p151 = por %p149, %p150
      %p153 = scmp.ne.s32.totalorder %s136, %s152
      %p154 = scmp.eq.s32.totalorder %s26, 0
      %p155 = por %p153, %p154
      %s156 = sld [smem:[#allocation4 + %s27]]
      %s157 = sld [smem:[#allocation4 + %s39]]
      %s158 = ssub.s32 %s156, %s157
      %p159 = scmp.eq.s32.totalorder %s158, 0
      %s161 = sadd.s32 %s160, 1
      %s162 = scalar_select %p159, %s160, %s161
      %p165 = pneg %p159
      %p166 = scmp.eq.s32.totalorder %s20, 15
      %p167 = por %p165, %p166
      %p168 = scmp.ne.s32.totalorder %s160, %s163
      %p169 = scmp.eq.s32.totalorder %s20, 0
      %p170 = por %p168, %p169
      %p171 = scmp.ne.s32.totalorder %s160, %s163
      %p172 = scmp.eq.s32.totalorder %s25, 15
      %p173 = por %p171, %p172
      %p174 = scmp.ne.s32.totalorder %s163, %s164
      %p175 = scmp.eq.s32.totalorder %s25, 0
      %p176 = por %p174, %p175
      %p177 = scmp.ne.s32.totalorder %s163, %s164
      %p178 = scmp.eq.s32.totalorder %s26, 15
      %p179 = por %p177, %p178
      %p181 = scmp.ne.s32.totalorder %s164, %s180
      %p182 = scmp.eq.s32.totalorder %s26, 0
      %p183 = por %p181, %p182
      %s184 = ssub.s32 %s27, %s39
      %p185 = scmp.eq.s32.totalorder %s184, 0
      %s187 = sadd.s32 %s186, 1
      %s188 = scalar_select %p185, %s186, %s187
      %p191 = pneg %p185
      %p192 = scmp.eq.s32.totalorder %s20, 15
      %p193 = por %p191, %p192
      %p194 = scmp.ne.s32.totalorder %s186, %s189
      %p195 = scmp.eq.s32.totalorder %s20, 0
      %p196 = por %p194, %p195
      %p197 = scmp.ne.s32.totalorder %s186, %s189
      %p198 = scmp.eq.s32.totalorder %s25, 15
      %p199 = por %p197, %p198
      %p200 = scmp.ne.s32.totalorder %s189, %s190
      %p201 = scmp.eq.s32.totalorder %s25, 0
      %p202 = por %p200, %p201
      %p203 = scmp.ne.s32.totalorder %s189, %s190
      %p204 = scmp.eq.s32.totalorder %s26, 15
      %p205 = por %p203, %p204
      %p207 = scmp.ne.s32.totalorder %s190, %s206
      %p208 = scmp.eq.s32.totalorder %s26, 0
      %p209 = por %p207, %p208
      %p210 = scmp.le.s32.totalorder 1, %s20
      %p211 = scmp.lt.s32.totalorder %s20, 17
      %p212 = pnand %p210, %p211
      %p213 = pneg %p212
      // Predicated region
      $region9: #{fixed_fmoe_forward.1} parent=5 // pred_check
        _
      $region10: #{fixed_fmoe_forward.1} parent=5 // pred_check_branch
        %215 = sbr.rel (%p212) target = $region12
      $region11: #{fixed_fmoe_forward.1} parent=5 // pred_region
        %s216 = ssub.s32 %s20, 1
      $region12: #{fixed_fmoe_forward.1} parent=5 // pred_fallthru
        _
      %p217 = scmp.lt.s32.totalorder %s20, 16
      // Predicated region
      $region13: #{fixed_fmoe_forward.1} parent=5 // pred_check
        %p218 = pneg %p217
      $region14: #{fixed_fmoe_forward.1} parent=5 // pred_check_branch
        %220 = sbr.rel (%p218) target = $region16
      $region15: #{fixed_fmoe_forward.1} parent=5 // pred_region
        // Predicated region
        $region17: #{fixed_fmoe_forward.1} parent=15 // pred_check
          %p221 = pneg %p52
        $region18: #{fixed_fmoe_forward.1} parent=15 // pred_check_branch
          %223 = sbr.rel (%p221) target = $region20
        $region19: #{fixed_fmoe_forward.1} parent=15 // pred_region
          %s224 = smul.u32 4, %s27
          %p225 = scmp.lt.s32.totalorder %s224, 31
          %s226 = scalar_select %p225, %s224, 31
          %s227 = smul.addr %s226, 4
          %s228 = scalar_lea.vmem %s1, %s227
          %s229 = smul.u32 4, %s27
        $region20: #{fixed_fmoe_forward.1} parent=15 // pred_fallthru
          _
        // Predicated region
        $region21: #{fixed_fmoe_forward.1} parent=15 // pred_check
          %p230 = pneg %p82
        $region22: #{fixed_fmoe_forward.1} parent=15 // pred_check_branch
          %232 = sbr.rel (%p230) target = $region24
        $region23: #{fixed_fmoe_forward.1} parent=15 // pred_region
          %s233 = sand.u32 %s72, 1
          %s234 = sand.u32 %s72, 1
          %s235 = smul.addr %s234, 64
          %s236 = scalar_lea.vmem [#allocation5], %s235
          %s237 = sld [smem:[#allocation4 + %s27]]
          %s238 = smul.addr %s237, 32
          %s239 = sadd.s32 %s28, %s238
          %s240 = smul.addr %s239, 4
          %s241 = scalar_lea.vmem %s2, %s240
          // Predicated region
          $region25: #{fixed_fmoe_forward.1} parent=23 // pred_check
            _
          $region26: #{fixed_fmoe_forward.1} parent=23 // pred_check_branch
            %243 = sbr.rel (0) target = $region28
          $region27: #{fixed_fmoe_forward.1} parent=23 // pred_region
            // Predicated region
            $region29: #{fixed_fmoe_forward.1} parent=27 // pred_check
              _
            $region30: #{fixed_fmoe_forward.1} parent=27 // pred_check_branch
              %245 = sbr.rel target = $region32
            $region31: #{fixed_fmoe_forward.1} parent=27 // pred_region
              // Predicated region
              $region44: #{fixed_fmoe_forward.1} parent=31 // pred_check
                _
              $region45: #{fixed_fmoe_forward.1} parent=31 // pred_check_branch
                %291 = sbr.rel (0) target = $region47
              $region46: #{fixed_fmoe_forward.1} parent=31 // pred_region
                loop: start=0, step=1, limit=1
                $region48: #{fixed_fmoe_forward.1} parent=46 // loop_pre_header
                  _
                $region49: #{fixed_fmoe_forward.1} parent=46 // loop_header
                  %s293 = sphi 0, %s297
                  %p294 = scmp.ge.s32.totalorder %s293, 1
                  %s298 = sphi %s241, %s241
                  %s299 = sphi %s236, %s236
                $region50: #{fixed_fmoe_forward.1} parent=46 // loop_header_branch
                  %296 = sbr.rel (%p294) target = $region54
                $region51: #{fixed_fmoe_forward.1} parent=46 // loop_body
                  _
                $region52: #{fixed_fmoe_forward.1} parent=46 // loop_footer
                  %s297 = sadd.s32 1, %s293
                $region53: #{fixed_fmoe_forward.1} parent=46 // loop_footer_branch
                  %292 = sbr.rel target = $region49
                $region54: #{fixed_fmoe_forward.1} parent=46 // loop_exit
                  _
                %s301 = ssub.s32 16, 1
                loop: start=0, step=1, limit=1
                $region55: #{fixed_fmoe_forward.1} parent=46 // loop_pre_header
                  _
                $region56: #{fixed_fmoe_forward.1} parent=46 // loop_header
                  %s303 = sphi 0, %s307
                  %p304 = scmp.ge.s32.totalorder %s303, 1
                  %s308 = sphi %s241, %s241
                  %s309 = sphi %s236, %s236
                $region57: #{fixed_fmoe_forward.1} parent=46 // loop_header_branch
                  %306 = sbr.rel (%p304) target = $region61
                $region58: #{fixed_fmoe_forward.1} parent=46 // loop_body
                  %v310 = vld [vmem:[%s308] sm:%s301]
                  %311 = vst [vmem:[%s309] sm:%s301] %v310
                  %v312 = vld [vmem:[%s308 + $0x8] sm:%s301]
                  %313 = vst [vmem:[%s309 + $0x4] sm:%s301] %v312
                  %v314 = vld [vmem:[%s308 + $0x10] sm:%s301]
                  %315 = vst [vmem:[%s309 + $0x8] sm:%s301] %v314
                  %v316 = vld [vmem:[%s308 + $0x18] sm:%s301]
                  %317 = vst [vmem:[%s309 + $0xc] sm:%s301] %v316
                  %v318 = vld [vmem:[%s308 + $0x20] sm:%s301]
                  %319 = vst [vmem:[%s309 + $0x10] sm:%s301] %v318
                  %v320 = vld [vmem:[%s308 + $0x28] sm:%s301]
                  %321 = vst [vmem:[%s309 + $0x14] sm:%s301] %v320
                  %v322 = vld [vmem:[%s308 + $0x30] sm:%s301]
                  %323 = vst [vmem:[%s309 + $0x18] sm:%s301] %v322
                  %v324 = vld [vmem:[%s308 + $0x38] sm:%s301]
                  %325 = vst [vmem:[%s309 + $0x1c] sm:%s301] %v324
                  %v326 = vld [vmem:[%s308 + $0x40] sm:%s301]
                  %327 = vst [vmem:[%s309 + $0x20] sm:%s301] %v326
                  %v328 = vld [vmem:[%s308 + $0x48] sm:%s301]
                  %329 = vst [vmem:[%s309 + $0x24] sm:%s301] %v328
                  %v330 = vld [vmem:[%s308 + $0x50] sm:%s301]
                  %331 = vst [vmem:[%s309 + $0x28] sm:%s301] %v330
                  %v332 = vld [vmem:[%s308 + $0x58] sm:%s301]
                  %333 = vst [vmem:[%s309 + $0x2c] sm:%s301] %v332
                  %v334 = vld [vmem:[%s308 + $0x60] sm:%s301]
                  %335 = vst [vmem:[%s309 + $0x30] sm:%s301] %v334
                  %v336 = vld [vmem:[%s308 + $0x68] sm:%s301]
                  %337 = vst [vmem:[%s309 + $0x34] sm:%s301] %v336
                  %v338 = vld [vmem:[%s308 + $0x70] sm:%s301]
                  %339 = vst [vmem:[%s309 + $0x38] sm:%s301] %v338
                  %v340 = vld [vmem:[%s308 + $0x78] sm:%s301]
                  %341 = vst [vmem:[%s309 + $0x3c] sm:%s301] %v340
                $region59: #{fixed_fmoe_forward.1} parent=46 // loop_footer
                  %s307 = sadd.s32 1, %s303
                $region60: #{fixed_fmoe_forward.1} parent=46 // loop_footer_branch
                  %302 = sbr.rel target = $region56
                $region61: #{fixed_fmoe_forward.1} parent=46 // loop_exit
                  _
              $region47: #{fixed_fmoe_forward.1} parent=31 // pred_fallthru
                _
            $region32: #{fixed_fmoe_forward.1} parent=27 // pred_fallthru
              _
            // Predicated region
            $region33: #{fixed_fmoe_forward.1} parent=27 // pred_check
              _
            $region34: #{fixed_fmoe_forward.1} parent=27 // pred_check_branch
              %247 = sbr.rel (0) target = $region36
            $region35: #{fixed_fmoe_forward.1} parent=27 // pred_region
              %s249 = ssub.s32 16, 1
              loop: start=0, step=1, limit=1
              $region37: #{fixed_fmoe_forward.1} parent=35 // loop_pre_header
                _
              $region38: #{fixed_fmoe_forward.1} parent=35 // loop_header
                %s251 = sphi 0, %s255
                %p252 = scmp.ge.s32.totalorder %s251, 1
                %s256 = sphi %s241, %s241
                %s257 = sphi %s236, %s236
              $region39: #{fixed_fmoe_forward.1} parent=35 // loop_header_branch
                %254 = sbr.rel (%p252) target = $region43
              $region40: #{fixed_fmoe_forward.1} parent=35 // loop_body
                %v258 = vld [vmem:[%s256] sm:%s249]
                %259 = vst [vmem:[%s257] sm:%s249] %v258
                %v260 = vld [vmem:[%s256 + $0x8] sm:%s249]
                %261 = vst [vmem:[%s257 + $0x4] sm:%s249] %v260
                %v262 = vld [vmem:[%s256 + $0x10] sm:%s249]
                %263 = vst [vmem:[%s257 + $0x8] sm:%s249] %v262
                %v264 = vld [vmem:[%s256 + $0x18] sm:%s249]
                %265 = vst [vmem:[%s257 + $0xc] sm:%s249] %v264
                %v266 = vld [vmem:[%s256 + $0x20] sm:%s249]
                %267 = vst [vmem:[%s257 + $0x10] sm:%s249] %v266
                %v268 = vld [vmem:[%s256 + $0x28] sm:%s249]
                %269 = vst [vmem:[%s257 + $0x14] sm:%s249] %v268
                %v270 = vld [vmem:[%s256 + $0x30] sm:%s249]
                %271 = vst [vmem:[%s257 + $0x18] sm:%s249] %v270
                %v272 = vld [vmem:[%s256 + $0x38] sm:%s249]
                %273 = vst [vmem:[%s257 + $0x1c] sm:%s249] %v272
                %v274 = vld [vmem:[%s256 + $0x40] sm:%s249]
                %275 = vst [vmem:[%s257 + $0x20] sm:%s249] %v274
                %v276 = vld [vmem:[%s256 + $0x48] sm:%s249]
                %277 = vst [vmem:[%s257 + $0x24] sm:%s249] %v276
                %v278 = vld [vmem:[%s256 + $0x50] sm:%s249]
                %279 = vst [vmem:[%s257 + $0x28] sm:%s249] %v278
                %v280 = vld [vmem:[%s256 + $0x58] sm:%s249]
                %281 = vst [vmem:[%s257 + $0x2c] sm:%s249] %v280
                %v282 = vld [vmem:[%s256 + $0x60] sm:%s249]
                %283 = vst [vmem:[%s257 + $0x30] sm:%s249] %v282
                %v284 = vld [vmem:[%s256 + $0x68] sm:%s249]
                %285 = vst [vmem:[%s257 + $0x34] sm:%s249] %v284
                %v286 = vld [vmem:[%s256 + $0x70] sm:%s249]
                %287 = vst [vmem:[%s257 + $0x38] sm:%s249] %v286
                %v288 = vld [vmem:[%s256 + $0x78] sm:%s249]
                %289 = vst [vmem:[%s257 + $0x3c] sm:%s249] %v288
              $region41: #{fixed_fmoe_forward.1} parent=35 // loop_footer
                %s255 = sadd.s32 1, %s251
              $region42: #{fixed_fmoe_forward.1} parent=35 // loop_footer_branch
                %250 = sbr.rel target = $region38
              $region43: #{fixed_fmoe_forward.1} parent=35 // loop_exit
                _
            $region36: #{fixed_fmoe_forward.1} parent=27 // pred_fallthru
              _
          $region28: #{fixed_fmoe_forward.1} parent=23 // pred_fallthru
            _
          %342 = vnop
        $region24: #{fixed_fmoe_forward.1} parent=15 // pred_fallthru
          _
        // Predicated region
        $region62: #{fixed_fmoe_forward.1} parent=15 // pred_check
          %p343 = pneg %p112
        $region63: #{fixed_fmoe_forward.1} parent=15 // pred_check_branch
          %345 = sbr.rel (%p343) target = $region65
        $region64: #{fixed_fmoe_forward.1} parent=15 // pred_region
          %s346 = sld [smem:[#allocation4 + %s27]]
          %p347 = scmp.lt.s32.totalorder %s346, 3
          %s348 = scalar_select %p347, %s346, 3
          %p349 = scmp.lt.s32.totalorder %s28, 1
          %s350 = scalar_select %p349, %s28, 1
          %s351 = smul.addr %s348, 2
          %s352 = sadd.s32 %s350, %s351
          %s353 = scalar_lea.vmem %s3, %s352
          %s354 = sld [smem:[#allocation4 + %s27]]
        $region65: #{fixed_fmoe_forward.1} parent=15 // pred_fallthru
          _
        // Predicated region
        $region66: #{fixed_fmoe_forward.1} parent=15 // pred_check
          %p355 = pneg %p142
        $region67: #{fixed_fmoe_forward.1} parent=15 // pred_check_branch
          %357 = sbr.rel (%p355) target = $region69
        $region68: #{fixed_fmoe_forward.1} parent=15 // pred_region
          %s358 = sld [smem:[#allocation4 + %s27]]
          %s359 = smul.u32 16, %s28
          %p360 = scmp.lt.s32.totalorder %s358, 3
          %s361 = scalar_select %p360, %s358, 3
          %p362 = scmp.lt.s32.totalorder %s359, 31
          %s363 = scalar_select %p362, %s359, 31
          %s364 = smul.addr %s361, 32
          %s365 = sadd.s32 %s363, %s364
          %s366 = smul.addr %s365, 4
          %s367 = scalar_lea.vmem %s4, %s366
          %s368 = sld [smem:[#allocation4 + %s27]]
          %s369 = smul.u32 16, %s28
        $region69: #{fixed_fmoe_forward.1} parent=15 // pred_fallthru
          _
        // Predicated region
        $region70: #{fixed_fmoe_forward.1} parent=15 // pred_check
          %p370 = pneg %p170
        $region71: #{fixed_fmoe_forward.1} parent=15 // pred_check_branch
          %372 = sbr.rel (%p370) target = $region73
        $region72: #{fixed_fmoe_forward.1} parent=15 // pred_region
          %s373 = sld [smem:[#allocation4 + %s27]]
          %p374 = scmp.lt.s32.totalorder %s373, 3
          %s375 = scalar_select %p374, %s373, 3
          %s376 = scalar_lea.vmem %s5, %s375
          %s377 = sld [smem:[#allocation4 + %s27]]
        $region73: #{fixed_fmoe_forward.1} parent=15 // pred_fallthru
          _
      $region16: #{fixed_fmoe_forward.1} parent=5 // pred_fallthru
        _
      %p378 = scmp.le.s32.totalorder 1, %s20
      %p379 = scmp.lt.s32.totalorder %s20, 17
      %p380 = pnand %p378, %p379
      %p381 = pneg %p380
      // Predicated region
      $region74: #{fixed_fmoe_forward.1} parent=5 // pred_check
        _
      $region75: #{fixed_fmoe_forward.1} parent=5 // pred_check_branch
        %383 = sbr.rel (%p380) target = $region77
      $region76: #{fixed_fmoe_forward.1} parent=5 // pred_region
        %s384 = ssub.s32 %s20, 1
        %s385 = sand.u32 %s75, 1
        %s386 = sand.u32 %s75, 1
        %s387 = smul.addr %s386, 64
        %s388 = scalar_lea.vmem [#allocation5], %s387
        // Predicated region
        $region78: #{fixed_fmoe_forward.1} parent=76 // pred_check
          %p389 = pneg %p88
        $region79: #{fixed_fmoe_forward.1} parent=76 // pred_check_branch
          %391 = sbr.rel (%p389) target = $region81
        $region80: #{fixed_fmoe_forward.1} parent=76 // pred_region
          _
        $region81: #{fixed_fmoe_forward.1} parent=76 // pred_fallthru
          _
        %s392 = smul.u32 4, %s29
        %p393 = scmp.lt.s32.totalorder %s392, 31
        %s394 = scalar_select %p393, %s392, 31
        %s395 = smul.addr %s394, 4
        %s396 = scalar_lea.vmem %s1, %s395
        %p397 = pneg %p58
        %p398 = pneg %p55
        %s399 = sand.u32 %s75, 1
        %s400 = sand.u32 %s75, 1
        %s401 = smul.addr %s400, 64
        %s402 = scalar_lea.vmem [#allocation5], %s401
        %p403 = pneg %p88
        %p404 = pneg %p85
        %s405 = sld [smem:[#allocation4 + %s29]]
        %p406 = scmp.lt.s32.totalorder %s405, 3
        %s407 = scalar_select %p406, %s405, 3
        %p408 = scmp.lt.s32.totalorder %s30, 1
        %s409 = scalar_select %p408, %s30, 1
        %s410 = smul.addr %s407, 2
        %s411 = sadd.s32 %s409, %s410
        %s412 = scalar_lea.vmem %s3, %s411
        %p413 = pneg %p118
        %p414 = pneg %p115
        %s415 = sld [smem:[#allocation4 + %s29]]
        %s416 = smul.u32 16, %s30
        %p417 = scmp.lt.s32.totalorder %s415, 3
        %s418 = scalar_select %p417, %s415, 3
        %p419 = scmp.lt.s32.totalorder %s416, 31
        %s420 = scalar_select %p419, %s416, 31
        %s421 = smul.addr %s418, 32
        %s422 = sadd.s32 %s420, %s421
        %s423 = smul.addr %s422, 4
        %s424 = scalar_lea.vmem %s4, %s423
        %p425 = pneg %p148
        %p426 = pneg %p145
        %s427 = sld [smem:[#allocation4 + %s29]]
        %p428 = scmp.lt.s32.totalorder %s427, 3
        %s429 = scalar_select %p428, %s427, 3
        %s430 = scalar_lea.vmem %s5, %s429
        %p431 = pneg %p176
        %p432 = pneg %p173
        %p433 = pneg %p202
        %p434 = pneg %p199
        %s435 = smul.u32 4, %s29
        %p436 = scmp.lt.s32.totalorder %s435, 31
        %s437 = scalar_select %p436, %s435, 31
        %s438 = smul.addr %s437, 8
        %s439 = scalar_lea.vmem %s6, %s438
        %s440 = smul.u32 4, %s29
        %p441 = scmp.lt.s32.totalorder %s440, 31
        %s442 = scalar_select %p441, %s440, 31
        %s443 = smul.addr %s442, 4
        %s444 = scalar_lea.vmem %s1, %s443
        %s445 = smul.u32 4, %s29
        %s446 = sld [smem:[#allocation4 + %s29]]
        %s447 = sld [smem:[#allocation4 + %s29]]
        %p448 = scmp.lt.s32.totalorder %s447, 3
        %s449 = scalar_select %p448, %s447, 3
        %p450 = scmp.lt.s32.totalorder %s30, 1
        %s451 = scalar_select %p450, %s30, 1
        %s452 = smul.addr %s449, 2
        %s453 = sadd.s32 %s451, %s452
        %s454 = scalar_lea.vmem %s3, %s453
        %s455 = sld [smem:[#allocation4 + %s29]]
        %s456 = sld [smem:[#allocation4 + %s29]]
        %s457 = smul.u32 16, %s30
        %p458 = scmp.lt.s32.totalorder %s456, 3
        %s459 = scalar_select %p458, %s456, 3
        %p460 = scmp.lt.s32.totalorder %s457, 31
        %s461 = scalar_select %p460, %s457, 31
        %s462 = smul.addr %s459, 32
        %s463 = sadd.s32 %s461, %s462
        %s464 = smul.addr %s463, 4
        %s465 = scalar_lea.vmem %s4, %s464
        %s466 = sld [smem:[#allocation4 + %s29]]
        %s467 = smul.u32 16, %s30
        %s468 = sld [smem:[#allocation4 + %s29]]
        %p469 = scmp.lt.s32.totalorder %s468, 3
        %s470 = scalar_select %p469, %s468, 3
        %s471 = scalar_lea.vmem %s5, %s470
        %s472 = sld [smem:[#allocation4 + %s29]]
        %s473 = smul.u32 4, %s29
        %p474 = scmp.lt.s32.totalorder %s473, 31
        %s475 = scalar_select %p474, %s473, 31
        %s476 = smul.addr %s475, 8
        %s477 = scalar_lea.vmem %s6, %s476
        %s478 = smul.u32 4, %s29
        %p479 = scmp.eq.s32.totalorder %s30, 0
        // Predicated region
        $region82: #{fixed_fmoe_forward.1} parent=76 // pred_check
          %p480 = pneg %p479
        $region83: #{fixed_fmoe_forward.1} parent=76 // pred_check_branch
          %482 = sbr.rel (%p480) target = $region85
        $region84: #{fixed_fmoe_forward.1} parent=76 // pred_region
          %483 = vst [vmem:[#allocation2] sm:$0xff] 0.0
          %484 = vst [vmem:[#allocation2 + $0x8] sm:$0xff] 0.0
          %485 = vst [vmem:[#allocation2 + $0x10] sm:$0xff] 0.0
          %486 = vst [vmem:[#allocation2 + $0x18] sm:$0xff] 0.0
        $region85: #{fixed_fmoe_forward.1} parent=76 // pred_fallthru
          _
        %v487 = vld [vmem:[%s444] sm:$0xf]
        %v488 = vld [vmem:[%s444 + $0x4] sm:$0xf]
        %v489 = vld [vmem:[%s444 + $0x8] sm:$0xf]
        %v490 = vld [vmem:[%s444 + $0xc] sm:$0xf]
        %v491 = vld [vmem:[%s388] sm:$0xf]
        %v492 = vld [vmem:[%s388 + $0x4] sm:$0xf]
        %v493 = vld [vmem:[%s388 + $0x8] sm:$0xf]
        %v494 = vld [vmem:[%s388 + $0xc] sm:$0xf]
        %v495 = vld [vmem:[%s388 + $0x10] sm:$0xf]
        %v496 = vld [vmem:[%s388 + $0x14] sm:$0xf]
        %v497 = vld [vmem:[%s388 + $0x18] sm:$0xf]
        %v498 = vld [vmem:[%s388 + $0x1c] sm:$0xf]
        %v499 = vld [vmem:[%s388 + $0x20] sm:$0xf]
        %v500 = vld [vmem:[%s388 + $0x24] sm:$0xf]
        %v501 = vld [vmem:[%s388 + $0x28] sm:$0xf]
        %v502 = vld [vmem:[%s388 + $0x2c] sm:$0xf]
        %v503 = vld [vmem:[%s388 + $0x30] sm:$0xf]
        %v504 = vld [vmem:[%s388 + $0x34] sm:$0xf]
        %v505 = vld [vmem:[%s388 + $0x38] sm:$0xf]
        %v506 = vld [vmem:[%s388 + $0x3c] sm:$0xf]
        %v507 = vld [vmem:[%s454] sm:$0x1]
        %v509 = vperm.slane %v507, 0
        %v515 = vunpack.c.l.b16 %v487
        %v516 = vunpack.c.l.b16 %v488
        %v517 = vunpack.c.l.b16 %v489
        %v518 = vunpack.c.l.b16 %v490
        %v519 = vpack.c.b16 %v516, %v515
        %v520 = vpack.c.b16 %v518, %v517
        %v539 = vunpack.c.l.b16 %v491
        %v540 = vunpack.c.l.b16 %v492
        %v541 = vunpack.c.l.b16 %v493
        %v542 = vunpack.c.l.b16 %v494
        %v543 = vunpack.c.l.b16 %v495
        %v544 = vunpack.c.l.b16 %v496
        %v545 = vunpack.c.l.b16 %v497
        %v546 = vunpack.c.l.b16 %v498
        %v547 = vunpack.c.l.b16 %v499
        %v548 = vunpack.c.l.b16 %v500
        %v549 = vunpack.c.l.b16 %v501
        %v550 = vunpack.c.l.b16 %v502
        %v551 = vunpack.c.l.b16 %v503
        %v552 = vunpack.c.l.b16 %v504
        %v553 = vunpack.c.l.b16 %v505
        %v554 = vunpack.c.l.b16 %v506
        %v555 = vpack.c.b16 %v540, %v539
        %v556 = vpack.c.b16 %v542, %v541
        %v557 = vpack.c.b16 %v544, %v543
        %v558 = vpack.c.b16 %v546, %v545
        %v559 = vpack.c.b16 %v548, %v547
        %v560 = vpack.c.b16 %v550, %v549
        %v561 = vpack.c.b16 %v552, %v551
        %v562 = vpack.c.b16 %v554, %v553
        %571 = vmatpush.bf16.msra.mxu0 %v562
        %572 = vmatpush.bf16.msra.mxu0 %v561
        %573 = vmatpush.bf16.msra.mxu0 %v560
        %574 = vmatpush.bf16.msra.mxu0 %v559
        %575 = vmatpush.bf16.msra.mxu0 %v558
        %576 = vmatpush.bf16.msra.mxu0 %v557
        %577 = vmatpush.bf16.msra.mxu0 %v556
        %578 = vmatpush.bf16.msra.mxu0 %v555
        %579 = vmatmul.bf16.gmra.mxu0 %v519
        %v580 = vpop.f32.mrf.mxu0
        %v581 = vadd.f32 %v509, %v580
        %v582 = vpop.f32.mrf.mxu0
        %v583 = vadd.f32 %v509, %v582
        %584 = vmatmul.bf16.gmra.mxu0 %v520
        %v585 = vpop.f32.mrf.mxu0
        %v586 = vadd.f32 %v509, %v585
        %v587 = vpop.f32.mrf.mxu0
        %v588 = vadd.f32 %v509, %v587
        %589 = vdwg.mxu0
        %v590 = vmul.f32 %v581, %v581
        %v591 = vmul.f32 %v583, %v583
        %v592 = vmul.f32 %v586, %v586
        %v593 = vmul.f32 %v588, %v588
        %v594 = vmul.f32 %v581, %v590
        %v595 = vmul.f32 %v583, %v591
        %v596 = vmul.f32 %v586, %v592
        %v597 = vmul.f32 %v588, %v593
        %v598 = vmul.f32 %v594, 0.044715
        %v599 = vmul.f32 %v595, 0.044715
        %v600 = vmul.f32 %v596, 0.044715
        %v601 = vmul.f32 %v597, 0.044715
        %v602 = vadd.f32 %v581, %v598
        %v603 = vadd.f32 %v583, %v599
        %v604 = vadd.f32 %v586, %v600
        %v605 = vadd.f32 %v588, %v601
        %v606 = vmul.f32 %v602, 0.7978846
        %v607 = vmul.f32 %v603, 0.7978846
        %v608 = vmul.f32 %v604, 0.7978846
        %v609 = vmul.f32 %v605, 0.7978846
        %v610 = vtanh.pop %v606
        %v611 = vtanh.pop %v607
        %v612 = vtanh.pop %v608
        %v613 = vtanh.pop %v609
        %v614 = vadd.f32 %v610, 1.0
        %v615 = vadd.f32 %v611, 1.0
        %v616 = vadd.f32 %v612, 1.0
        %v617 = vadd.f32 %v613, 1.0
        %v618 = vmul.f32 %v614, 0.5
        %v619 = vmul.f32 %v615, 0.5
        %v620 = vmul.f32 %v616, 0.5
        %v621 = vmul.f32 %v617, 0.5
        %v622 = vmul.f32 %v581, %v618
        %v623 = vmul.f32 %v583, %v619
        %v624 = vmul.f32 %v586, %v620
        %v625 = vmul.f32 %v588, %v621
        %v626 = vld [vmem:[#allocation2] sm:$0xff]
        %v627 = vld [vmem:[#allocation2 + $0x8] sm:$0xff]
        %v628 = vld [vmem:[#allocation2 + $0x10] sm:$0xff]
        %v629 = vld [vmem:[#allocation2 + $0x18] sm:$0xff]
        %v630 = vpack.c.bf16 %v623, %v622
        %v631 = vpack.c.bf16 %v625, %v624
        %v632 = vld [vmem:[%s465] sm:$0xf]
        %v633 = vld [vmem:[%s465 + $0x4] sm:$0xf]
        %v634 = vld [vmem:[%s465 + $0x8] sm:$0xf]
        %v635 = vld [vmem:[%s465 + $0xc] sm:$0xf]
        %v636 = vld [vmem:[%s465 + $0x10] sm:$0xf]
        %v637 = vld [vmem:[%s465 + $0x14] sm:$0xf]
        %v638 = vld [vmem:[%s465 + $0x18] sm:$0xf]
        %v639 = vld [vmem:[%s465 + $0x1c] sm:$0xf]
        %v640 = vld [vmem:[%s465 + $0x20] sm:$0xf]
        %v641 = vld [vmem:[%s465 + $0x24] sm:$0xf]
        %v642 = vld [vmem:[%s465 + $0x28] sm:$0xf]
        %v643 = vld [vmem:[%s465 + $0x2c] sm:$0xf]
        %v644 = vld [vmem:[%s465 + $0x30] sm:$0xf]
        %v645 = vld [vmem:[%s465 + $0x34] sm:$0xf]
        %v646 = vld [vmem:[%s465 + $0x38] sm:$0xf]
        %v647 = vld [vmem:[%s465 + $0x3c] sm:$0xf]
        %v664 = vunpack.c.l.b16 %v632
        %v665 = vunpack.c.l.b16 %v633
        %v666 = vunpack.c.l.b16 %v634
        %v667 = vunpack.c.l.b16 %v635
        %v668 = vunpack.c.l.b16 %v636
        %v669 = vunpack.c.l.b16 %v637
        %v670 = vunpack.c.l.b16 %v638
        %v671 = vunpack.c.l.b16 %v639
        %v672 = vunpack.c.l.b16 %v640
        %v673 = vunpack.c.l.b16 %v641
        %v674 = vunpack.c.l.b16 %v642
        %v675 = vunpack.c.l.b16 %v643
        %v676 = vunpack.c.l.b16 %v644
        %v677 = vunpack.c.l.b16 %v645
        %v678 = vunpack.c.l.b16 %v646
        %v679 = vunpack.c.l.b16 %v647
        %v680 = vpack.c.b16 %v665, %v664
        %v681 = vpack.c.b16 %v667, %v666
        %v682 = vpack.c.b16 %v669, %v668
        %v683 = vpack.c.b16 %v671, %v670
        %v684 = vpack.c.b16 %v673, %v672
        %v685 = vpack.c.b16 %v675, %v674
        %v686 = vpack.c.b16 %v677, %v676
        %v687 = vpack.c.b16 %v679, %v678
        %696 = vmatpush.bf16.msra.mxu0 %v687
        %697 = vmatpush.bf16.msra.mxu0 %v686
        %698 = vmatpush.bf16.msra.mxu0 %v685
        %699 = vmatpush.bf16.msra.mxu0 %v684
        %700 = vmatpush.bf16.msra.mxu0 %v683
        %701 = vmatpush.bf16.msra.mxu0 %v682
        %702 = vmatpush.bf16.msra.mxu0 %v681
        %703 = vmatpush.bf16.msra.mxu0 %v680
        %704 = vmatmul.bf16.gmra.mxu0 %v630
        %v705 = vpop.f32.mrf.mxu0
        %v706 = vadd.f32 0.0, %v705
        %v707 = vpop.f32.mrf.mxu0
        %v708 = vadd.f32 0.0, %v707
        %709 = vmatmul.bf16.gmra.mxu0 %v631
        %v710 = vpop.f32.mrf.mxu0
        %v711 = vadd.f32 0.0, %v710
        %v712 = vpop.f32.mrf.mxu0
        %v713 = vadd.f32 0.0, %v712
        %714 = vdwg.mxu0
        %v715 = vadd.f32 %v626, %v706
        %v716 = vadd.f32 %v627, %v708
        %v717 = vadd.f32 %v628, %v711
        %v718 = vadd.f32 %v629, %v713
        %719 = vst [vmem:[#allocation2] sm:$0xff] %v715
        %720 = vst [vmem:[#allocation2 + $0x8] sm:$0xff] %v716
        %721 = vst [vmem:[#allocation2 + $0x10] sm:$0xff] %v717
        %722 = vst [vmem:[#allocation2 + $0x18] sm:$0xff] %v718
        %p723 = scmp.eq.s32.totalorder %s30, 1
        // Predicated region
        $region86: #{fixed_fmoe_forward.1} parent=76 // pred_check
          %p724 = pneg %p723
        $region87: #{fixed_fmoe_forward.1} parent=76 // pred_check_branch
          %726 = sbr.rel (%p724) target = $region89
        $region88: #{fixed_fmoe_forward.1} parent=76 // pred_region
          %v727 = vld [vmem:[#allocation2] sm:$0xff]
          %v728 = vld [vmem:[#allocation2 + $0x8] sm:$0xff]
          %v729 = vld [vmem:[#allocation2 + $0x10] sm:$0xff]
          %v730 = vld [vmem:[#allocation2 + $0x18] sm:$0xff]
          %v731 = vld [vmem:[%s471] sm:$0x1]
          %v733 = vperm.slane %v731, 0
          %v735 = vadd.f32 %v727, %v733
          %v736 = vadd.f32 %v728, %v733
          %v737 = vadd.f32 %v729, %v733
          %v738 = vadd.f32 %v730, %v733
          %739 = vst [vmem:[%s477] sm:$0xff] %v735
          %740 = vst [vmem:[%s477 + $0x8] sm:$0xff] %v736
          %741 = vst [vmem:[%s477 + $0x10] sm:$0xff] %v737
          %742 = vst [vmem:[%s477 + $0x18] sm:$0xff] %v738
        $region89: #{fixed_fmoe_forward.1} parent=76 // pred_fallthru
          _
        %s743 = smul.u32 4, %s29
        %p744 = scmp.lt.s32.totalorder %s743, 31
        %s745 = scalar_select %p744, %s743, 31
        %s746 = smul.addr %s745, 8
        %s747 = scalar_lea.vmem %s6, %s746
        // Predicated region
        $region90: #{fixed_fmoe_forward.1} parent=76 // pred_check
          %p748 = pneg %p199
        $region91: #{fixed_fmoe_forward.1} parent=76 // pred_check_branch
          %750 = sbr.rel (%p748) target = $region93
        $region92: #{fixed_fmoe_forward.1} parent=76 // pred_region
          %s751 = smul.u32 4, %s29
        $region93: #{fixed_fmoe_forward.1} parent=76 // pred_fallthru
          _
      $region77: #{fixed_fmoe_forward.1} parent=5 // pred_fallthru
        _
      %p752 = scmp.le.s32.totalorder 2, %s20
      // Predicated region
      $region94: #{fixed_fmoe_forward.1} parent=5 // pred_check
        %p753 = pneg %p752
      $region95: #{fixed_fmoe_forward.1} parent=5 // pred_check_branch
        %755 = sbr.rel (%p753) target = $region97
      $region96: #{fixed_fmoe_forward.1} parent=5 // pred_region
        %s756 = ssub.s32 %s20, 2
        // Predicated region
        $region98: #{fixed_fmoe_forward.1} parent=96 // pred_check
          %p757 = pneg %p205
        $region99: #{fixed_fmoe_forward.1} parent=96 // pred_check_branch
          %759 = sbr.rel (%p757) target = $region101
        $region100: #{fixed_fmoe_forward.1} parent=96 // pred_region
          %s760 = smul.u32 4, %s31
          %p761 = scmp.lt.s32.totalorder %s760, 31
          %s762 = scalar_select %p761, %s760, 31
          %s763 = smul.addr %s762, 8
          %s764 = scalar_lea.vmem %s6, %s763
        $region101: #{fixed_fmoe_forward.1} parent=96 // pred_fallthru
          _
      $region97: #{fixed_fmoe_forward.1} parent=5 // pred_fallthru
        _
    $region6: #{fixed_fmoe_forward.1} parent=1 // loop_footer
      %s24 = sadd.s32 1, %s20
    $region7: #{fixed_fmoe_forward.1} parent=1 // loop_footer_branch
      %19 = sbr.rel target = $region3
    $region8: #{fixed_fmoe_forward.1} parent=1 // loop_exit
      _

</llo_original>
